<compile_context>
chip_gen: v7x
topology: tpu7x:2x2x1
jax: 0.10.0
libtpu: 0.0.40
codegen_flags: <defaults>
</compile_context>

<pallas_src>
import functools

import jax
import jax.numpy as jnp
from jax import lax
from jax.experimental import pallas as pl
from jax.experimental.pallas import tpu as pltpu

EPS = 1e-5


def _bn_train(h, gamma, beta, eps):
    """BatchNorm1d, training mode (batch stats, biased var). h: (N, C, L); gamma/beta: (1, C, 1)."""
    count = h.shape[0] * h.shape[2]
    mean = jnp.sum(jnp.sum(h, axis=2, keepdims=True), axis=0, keepdims=True) / count
    d = h - mean
    var = jnp.sum(jnp.sum(d * d, axis=2, keepdims=True), axis=0, keepdims=True) / count
    return d * lax.rsqrt(var + eps) * gamma + beta


def _im2col_k3_s1(h):
    """(N, C, L) -> (N, 3*C, L): taps [h[l-1] | h[l] | h[l+1]] for a k=3, s=1, p=1 conv."""
    n, c, l = h.shape
    z = jnp.zeros((n, c, 1), h.dtype)
    left = jnp.concatenate([z, h[:, :, : l - 1]], axis=2)     # tap k=0 : x[l-1]
    right = jnp.concatenate([h[:, :, 1:], z], axis=2)         # tap k=2 : x[l+1]
    return jnp.concatenate([left, h, right], axis=1)          # tap-major channel blocks


def _batched_matmul(w, x):
    """w: (C_out, K), x: (N, K, L) -> (N, C_out, L); single fused MXU matmul per batch, f32 acc."""
    n = x.shape[0]
    wb = jnp.broadcast_to(w, (n,) + w.shape)
    return jnp.einsum("nok,nkl->nol", wb, x, preferred_element_type=jnp.float32)


def _resblock_kernel(*refs, has_downsample, im2col_in_kernel, eps):
    o_ref = refs[-1]
    if im2col_in_kernel:                 # stride == 1: conv1 taps are built in VMEM from x
        x_ref = refs[0]
        base = 1
    else:                                # strided conv1: wrapper-packed im2col + strided identity
        xc1_ref, xid_ref = refs[0], refs[1]
        base = 2
    w1_ref, w2_ref, g1_ref, b1_ref, g2_ref, b2_ref = refs[base:base + 6]

    # ---- conv1 (k=3, pad=1; stride folded into the im2col), one fused matmul ----
    if im2col_in_kernel:
        x = x_ref[...]                                   # (N, C_in, L)
        xc1 = _im2col_k3_s1(x)                           # (N, 3*C_in, L_out)
    else:
        xc1 = xc1_ref[...]                               # (N, 3*C_in, L_out)
    h = _batched_matmul(w1_ref[...], xc1)                # (N, C_out, L_out)

    # ---- bn1 (training-mode batch stats) + relu ----
    h = _bn_train(h, g1_ref[...], b1_ref[...], eps)
    h = jnp.maximum(h, 0.0)

    # ---- conv2 (k=3, s=1, pad=1), one fused matmul ----
    out = _batched_matmul(w2_ref[...], _im2col_k3_s1(h))
    out = _bn_train(out, g2_ref[...], b2_ref[...], eps)

    # ---- shortcut: raw identity, or 1x1 (possibly strided) conv + BN ----
    if has_downsample:
        wd_ref, gd_ref, bd_ref = refs[base + 6:base + 9]
        xid = x if im2col_in_kernel else xid_ref[...]    # (N, C_in, L_out)
        ident = _batched_matmul(wd_ref[...], xid)        # 1x1 conv
        ident = _bn_train(ident, gd_ref[...], bd_ref[...], eps)
    else:
        ident = x                                        # stride==1 and C_in==C_out

    o_ref[...] = jnp.maximum(out + ident, 0.0).astype(o_ref.dtype)


def residual_block_1d(x_ncl, params, stride):
    """x_ncl: (N, C_in, L) float32, PyTorch NCL layout. Returns (N, C_out, L_out) in NCL."""
    n, c_in, length = x_ncl.shape
    c_out = params["w1"].shape[0]
    has_ds = (stride != 1) or (c_in != c_out)
    l_out = (length - 1) // stride + 1                   # == (L + 2*1 - 3)//stride + 1

    x = x_ncl.astype(jnp.float32)

    # Stacked conv weights: (C_out, C_in, 3) -> (C_out, 3*C_in) with tap-major columns,
    # matching the im2col ordering [x[l-1] | x[l] | x[l+1]].
    w1s = jnp.transpose(params["w1"], (0, 2, 1)).reshape(c_out, 3 * c_in)
    w2s = jnp.transpose(params["w2"], (0, 2, 1)).reshape(c_out, 3 * c_out)
    g1 = params["g1"].reshape(1, c_out, 1)
    b1 = params["b1"].reshape(1, c_out, 1)
    g2 = params["g2"].reshape(1, c_out, 1)
    b2 = params["b2"].reshape(1, c_out, 1)

    im2col_in_kernel = (stride == 1)
    args = []
    if im2col_in_kernel:
        args.append(x)                                   # single copy of x; taps formed in VMEM
    else:
        # Strided first conv: pack the 3 taps once in the wrapper (lane-strided access
        # handled by XLA); the identity path gets the strided samples.
        x_pad = jnp.pad(x, ((0, 0), (0, 0), (1, 1)))
        xc1 = jnp.concatenate(
            [x_pad[:, :, k:k + stride * (l_out - 1) + 1:stride] for k in range(3)], axis=1)
        xid = x[:, :, ::stride]
        args += [xc1, xid]
    args += [w1s, w2s, g1, b1, g2, b2]
    if has_ds:
        args += [params["wd"].astype(jnp.float32),
                 params["gd"].reshape(1, c_out, 1),
                 params["bd"].reshape(1, c_out, 1)]

    kernel = functools.partial(_resblock_kernel, has_downsample=has_ds,
                               im2col_in_kernel=im2col_in_kernel, eps=EPS)
    vmem = pl.BlockSpec(memory_space=pltpu.MemorySpace.VMEM)

    io_bytes = sum(int(a.size) * a.dtype.itemsize for a in args) + n * c_out * l_out * 4
    vmem_limit = int(min(32 * 1024 * 1024, max(8 * 1024 * 1024, 16 * io_bytes)))

    return pl.pallas_call(
        kernel,
        out_shape=jax.ShapeDtypeStruct((n, c_out, l_out), jnp.float32),
        in_specs=[vmem] * len(args),
        out_specs=vmem,
        compiler_params=pltpu.CompilerParams(vmem_limit_bytes=vmem_limit),
    )(*args)


# ---------------- deterministic parameter init (matches module shapes) ----------------
def init_params(key, c_in, c_out, stride):
    ks = jax.random.split(key, 9)

    def conv_init(k, shape):
        fan_in = shape[1] * (shape[2] if len(shape) == 3 else 1)
        return jax.random.normal(k, shape, jnp.float32) / jnp.sqrt(float(fan_in))

    p = {
        "w1": conv_init(ks[0], (c_out, c_in, 3)),
        "w2": conv_init(ks[1], (c_out, c_out, 3)),
        "g1": 1.0 + 0.1 * jax.random.normal(ks[2], (c_out,), jnp.float32),
        "b1": 0.1 * jax.random.normal(ks[3], (c_out,), jnp.float32),
        "g2": 1.0 + 0.1 * jax.random.normal(ks[4], (c_out,), jnp.float32),
        "b2": 0.1 * jax.random.normal(ks[5], (c_out,), jnp.float32),
    }
    if stride != 1 or c_in != c_out:
        p["wd"] = conv_init(ks[6], (c_out, c_in))                     # 1x1 conv weight
        p["gd"] = 1.0 + 0.1 * jax.random.normal(ks[7], (c_out,), jnp.float32)
        p["bd"] = 0.1 * jax.random.normal(ks[8], (c_out,), jnp.float32)
    return p


# ---------------- pure-JAX reference (NCL, mirrors the PyTorch forward) ----------------
def ref_forward(x, params, stride):
    def conv1d(x, w, s, p):
        return lax.conv_general_dilated(x, w, (s,), [(p, p)],
                                        dimension_numbers=("NCH", "OIH", "NCH"))

    def bn(h, g, b):
        mean = jnp.mean(h, axis=(0, 2), keepdims=True)
        var = jnp.mean((h - mean) ** 2, axis=(0, 2), keepdims=True)
        return (h - mean) / jnp.sqrt(var + EPS) * g.reshape(1, -1, 1) + b.reshape(1, -1, 1)

    c_in = x.shape[1]
    c_out = params["w1"].shape[0]
    out = conv1d(x, params["w1"], stride, 1)
    out = jnp.maximum(bn(out, params["g1"], params["b1"]), 0.0)
    out = conv1d(out, params["w2"], 1, 1)
    out = bn(out, params["g2"], params["b2"])
    if stride != 1 or c_in != c_out:
        ident = conv1d(x, params["wd"][:, :, None], stride, 0)
        ident = bn(ident, params["gd"], params["bd"])
    else:
        ident = x
    return jnp.maximum(out + ident, 0.0)


if __name__ == "__main__":
    key = jax.random.PRNGKey(0)
    kx1, kp1, kx2, kp2, kx3, kp3 = jax.random.split(key, 6)

    # Case 1: stride=2, C_in != C_out -> strided downsample (1x1 conv + BN), wrapper im2col.
    x1 = jax.random.normal(kx1, (2, 4, 16), jnp.float32)   # NCL like PyTorch
    p1 = init_params(kp1, c_in=4, c_out=8, stride=2)
    y1 = jax.block_until_ready(residual_block_1d(x1, p1, stride=2))
    r1 = ref_forward(x1, p1, stride=2)
    assert y1.shape == (2, 8, 8), y1.shape
    assert jnp.allclose(y1, r1, atol=1e-3, rtol=1e-3), float(jnp.max(jnp.abs(y1 - r1)))

    # Case 2: stride=1, C_in == C_out -> plain identity shortcut, in-kernel im2col.
    x2 = jax.random.normal(kx2, (2, 8, 16), jnp.float32)
    p2 = init_params(kp2, c_in=8, c_out=8, stride=1)
    y2 = jax.block_until_ready(residual_block_1d(x2, p2, stride=1))
    r2 = ref_forward(x2, p2, stride=1)
    assert y2.shape == (2, 8, 16), y2.shape
    assert jnp.allclose(y2, r2, atol=1e-3, rtol=1e-3), float(jnp.max(jnp.abs(y2 - r2)))

    # Case 3: stride=1, C_in != C_out -> 1x1 stride-1 projection shortcut, in-kernel im2col.
    x3 = jax.random.normal(kx3, (2, 4, 16), jnp.float32)
    p3 = init_params(kp3, c_in=4, c_out=8, stride=1)
    y3 = jax.block_until_ready(residual_block_1d(x3, p3, stride=1))
    r3 = ref_forward(x3, p3, stride=1)
    assert y3.shape == (2, 8, 16), y3.shape
    assert jnp.allclose(y3, r3, atol=1e-3, rtol=1e-3), float(jnp.max(jnp.abs(y3 - r3)))

    print("KERNEL_OK")
</pallas_src>

<mosaic_0001>
module attributes {stable_mosaic.version = 11 : i64} {
  func.func @_resblock_kernel(%arg0: memref<2x12x8xf32, #tpu.memory_space<vmem>>, %arg1: memref<2x4x8xf32, #tpu.memory_space<vmem>>, %arg2: memref<8x12xf32, #tpu.memory_space<vmem>>, %arg3: memref<8x24xf32, #tpu.memory_space<vmem>>, %arg4: memref<1x8x1xf32, #tpu.memory_space<vmem>>, %arg5: memref<1x8x1xf32, #tpu.memory_space<vmem>>, %arg6: memref<1x8x1xf32, #tpu.memory_space<vmem>>, %arg7: memref<1x8x1xf32, #tpu.memory_space<vmem>>, %arg8: memref<8x4xf32, #tpu.memory_space<vmem>>, %arg9: memref<1x8x1xf32, #tpu.memory_space<vmem>>, %arg10: memref<1x8x1xf32, #tpu.memory_space<vmem>>, %arg11: memref<2x8x8xf32, #tpu.memory_space<vmem>>) attributes {dimension_semantics = [], scalar_prefetch = 0 : i64, scratch_operands = 0 : i64, tpu.core_type = #tpu.core_type<tc>} {
    %c0 = arith.constant 0 : index
    %c0_0 = arith.constant 0 : index
    %c0_1 = arith.constant 0 : index
    %0 = vector.load %arg0[%c0, %c0_0, %c0_1] : memref<2x12x8xf32, #tpu.memory_space<vmem>>, vector<2x12x8xf32>
    %c0_2 = arith.constant 0 : index
    %c0_3 = arith.constant 0 : index
    %1 = vector.load %arg2[%c0_2, %c0_3] : memref<8x12xf32, #tpu.memory_space<vmem>>, vector<8x12xf32>
    %2 = vector.shape_cast %1 : vector<8x12xf32> to vector<1x8x12xf32>
    %3 = vector.broadcast %2 : vector<1x8x12xf32> to vector<2x8x12xf32>
    "tpu.trace_start"() <{level = 10 : i32, message = "nok,nkl->nol"}> : () -> ()
    %cst = arith.constant dense<0.000000e+00> : vector<2x8x8xf32>
    %4 = tpu.matmul %3, %0, %cst {dimension_numbers = #tpu.dot_dimension_numbers<[2], [1], [1], [2], [0, 0, 0, 1, 1, 2], [0], [0]>} : vector<2x8x12xf32>, vector<2x12x8xf32>, vector<2x8x8xf32> -> vector<2x8x8xf32>
    "tpu.trace_stop"() : () -> ()
    %c0_4 = arith.constant 0 : index
    %c0_5 = arith.constant 0 : index
    %c0_6 = arith.constant 0 : index
    %5 = vector.load %arg4[%c0_4, %c0_5, %c0_6] : memref<1x8x1xf32, #tpu.memory_space<vmem>>, vector<1x8x1xf32>
    %c0_7 = arith.constant 0 : index
    %c0_8 = arith.constant 0 : index
    %c0_9 = arith.constant 0 : index
    %6 = vector.load %arg5[%c0_7, %c0_8, %c0_9] : memref<1x8x1xf32, #tpu.memory_space<vmem>>, vector<1x8x1xf32>
    %cst_10 = arith.constant dense<0.000000e+00> : vector<2x8xf32>
    %7 = vector.multi_reduction <add>, %4, %cst_10 [2] : vector<2x8x8xf32> to vector<2x8xf32>
    %8 = vector.shape_cast %7 : vector<2x8xf32> to vector<2x8x1xf32>
    %cst_11 = arith.constant dense<0.000000e+00> : vector<8x1xf32>
    %9 = vector.multi_reduction <add>, %8, %cst_11 [0] : vector<2x8x1xf32> to vector<8x1xf32>
    %10 = vector.shape_cast %9 : vector<8x1xf32> to vector<1x8x1xf32>
    %cst_12 = arith.constant 1.600000e+01 : f32
    %11 = vector.broadcast %cst_12 : f32 to vector<1x8x1xf32>
    %12 = arith.divf %10, %11 : vector<1x8x1xf32>
    %13 = vector.broadcast %12 : vector<1x8x1xf32> to vector<2x8x8xf32>
    %14 = arith.subf %4, %13 : vector<2x8x8xf32>
    %15 = arith.mulf %14, %14 : vector<2x8x8xf32>
    %cst_13 = arith.constant dense<0.000000e+00> : vector<2x8xf32>
    %16 = vector.multi_reduction <add>, %15, %cst_13 [2] : vector<2x8x8xf32> to vector<2x8xf32>
    %17 = vector.shape_cast %16 : vector<2x8xf32> to vector<2x8x1xf32>
    %cst_14 = arith.constant dense<0.000000e+00> : vector<8x1xf32>
    %18 = vector.multi_reduction <add>, %17, %cst_14 [0] : vector<2x8x1xf32> to vector<8x1xf32>
    %19 = vector.shape_cast %18 : vector<8x1xf32> to vector<1x8x1xf32>
    %cst_15 = arith.constant 1.600000e+01 : f32
    %20 = vector.broadcast %cst_15 : f32 to vector<1x8x1xf32>
    %21 = arith.divf %19, %20 : vector<1x8x1xf32>
    %cst_16 = arith.constant 9.99999974E-6 : f32
    %22 = vector.broadcast %cst_16 : f32 to vector<1x8x1xf32>
    %23 = arith.addf %21, %22 : vector<1x8x1xf32>
    %24 = math.rsqrt %23 : vector<1x8x1xf32>
    %25 = vector.broadcast %24 : vector<1x8x1xf32> to vector<2x8x8xf32>
    %26 = arith.mulf %14, %25 : vector<2x8x8xf32>
    %27 = vector.broadcast %5 : vector<1x8x1xf32> to vector<2x8x8xf32>
    %28 = arith.mulf %26, %27 : vector<2x8x8xf32>
    %29 = vector.broadcast %6 : vector<1x8x1xf32> to vector<2x8x8xf32>
    %30 = arith.addf %28, %29 : vector<2x8x8xf32>
    %cst_17 = arith.constant 0.000000e+00 : f32
    %31 = vector.broadcast %cst_17 : f32 to vector<2x8x8xf32>
    %32 = arith.maximumf %30, %31 : vector<2x8x8xf32>
    %c0_18 = arith.constant 0 : index
    %c0_19 = arith.constant 0 : index
    %33 = vector.load %arg3[%c0_18, %c0_19] : memref<8x24xf32, #tpu.memory_space<vmem>>, vector<8x24xf32>
    %cst_20 = arith.constant 0.000000e+00 : f32
    %34 = vector.broadcast %cst_20 : f32 to vector<2x8x1xf32>
    %35 = vector.extract_strided_slice %32 {offsets = [0, 0, 0], sizes = [2, 8, 7], strides = [1, 1, 1]} : vector<2x8x8xf32> to vector<2x8x7xf32>
    %36 = tpu.concatenate %34, %35 in 2 : vector<2x8x1xf32>, vector<2x8x7xf32> -> vector<2x8x8xf32>
    %37 = vector.extract_strided_slice %32 {offsets = [0, 0, 1], sizes = [2, 8, 7], strides = [1, 1, 1]} : vector<2x8x8xf32> to vector<2x8x7xf32>
    %38 = tpu.concatenate %37, %34 in 2 : vector<2x8x7xf32>, vector<2x8x1xf32> -> vector<2x8x8xf32>
    %39 = tpu.concatenate %36, %32, %38 in 1 : vector<2x8x8xf32>, vector<2x8x8xf32>, vector<2x8x8xf32> -> vector<2x24x8xf32>
    %40 = vector.shape_cast %33 : vector<8x24xf32> to vector<1x8x24xf32>
    %41 = vector.broadcast %40 : vector<1x8x24xf32> to vector<2x8x24xf32>
    "tpu.trace_start"() <{level = 10 : i32, message = "nok,nkl->nol"}> : () -> ()
    %cst_21 = arith.constant dense<0.000000e+00> : vector<2x8x8xf32>
    %42 = tpu.matmul %41, %39, %cst_21 {dimension_numbers = #tpu.dot_dimension_numbers<[2], [1], [1], [2], [0, 0, 0, 1, 1, 2], [0], [0]>} : vector<2x8x24xf32>, vector<2x24x8xf32>, vector<2x8x8xf32> -> vector<2x8x8xf32>
    "tpu.trace_stop"() : () -> ()
    %c0_22 = arith.constant 0 : index
    %c0_23 = arith.constant 0 : index
    %c0_24 = arith.constant 0 : index
    %43 = vector.load %arg6[%c0_22, %c0_23, %c0_24] : memref<1x8x1xf32, #tpu.memory_space<vmem>>, vector<1x8x1xf32>
    %c0_25 = arith.constant 0 : index
    %c0_26 = arith.constant 0 : index
    %c0_27 = arith.constant 0 : index
    %44 = vector.load %arg7[%c0_25, %c0_26, %c0_27] : memref<1x8x1xf32, #tpu.memory_space<vmem>>, vector<1x8x1xf32>
    %cst_28 = arith.constant dense<0.000000e+00> : vector<2x8xf32>
    %45 = vector.multi_reduction <add>, %42, %cst_28 [2] : vector<2x8x8xf32> to vector<2x8xf32>
    %46 = vector.shape_cast %45 : vector<2x8xf32> to vector<2x8x1xf32>
    %cst_29 = arith.constant dense<0.000000e+00> : vector<8x1xf32>
    %47 = vector.multi_reduction <add>, %46, %cst_29 [0] : vector<2x8x1xf32> to vector<8x1xf32>
    %48 = vector.shape_cast %47 : vector<8x1xf32> to vector<1x8x1xf32>
    %cst_30 = arith.constant 1.600000e+01 : f32
    %49 = vector.broadcast %cst_30 : f32 to vector<1x8x1xf32>
    %50 = arith.divf %48, %49 : vector<1x8x1xf32>
    %51 = vector.broadcast %50 : vector<1x8x1xf32> to vector<2x8x8xf32>
    %52 = arith.subf %42, %51 : vector<2x8x8xf32>
    %53 = arith.mulf %52, %52 : vector<2x8x8xf32>
    %cst_31 = arith.constant dense<0.000000e+00> : vector<2x8xf32>
    %54 = vector.multi_reduction <add>, %53, %cst_31 [2] : vector<2x8x8xf32> to vector<2x8xf32>
    %55 = vector.shape_cast %54 : vector<2x8xf32> to vector<2x8x1xf32>
    %cst_32 = arith.constant dense<0.000000e+00> : vector<8x1xf32>
    %56 = vector.multi_reduction <add>, %55, %cst_32 [0] : vector<2x8x1xf32> to vector<8x1xf32>
    %57 = vector.shape_cast %56 : vector<8x1xf32> to vector<1x8x1xf32>
    %cst_33 = arith.constant 1.600000e+01 : f32
    %58 = vector.broadcast %cst_33 : f32 to vector<1x8x1xf32>
    %59 = arith.divf %57, %58 : vector<1x8x1xf32>
    %cst_34 = arith.constant 9.99999974E-6 : f32
    %60 = vector.broadcast %cst_34 : f32 to vector<1x8x1xf32>
    %61 = arith.addf %59, %60 : vector<1x8x1xf32>
    %62 = math.rsqrt %61 : vector<1x8x1xf32>
    %63 = vector.broadcast %62 : vector<1x8x1xf32> to vector<2x8x8xf32>
    %64 = arith.mulf %52, %63 : vector<2x8x8xf32>
    %65 = vector.broadcast %43 : vector<1x8x1xf32> to vector<2x8x8xf32>
    %66 = arith.mulf %64, %65 : vector<2x8x8xf32>
    %67 = vector.broadcast %44 : vector<1x8x1xf32> to vector<2x8x8xf32>
    %68 = arith.addf %66, %67 : vector<2x8x8xf32>
    %c0_35 = arith.constant 0 : index
    %c0_36 = arith.constant 0 : index
    %c0_37 = arith.constant 0 : index
    %69 = vector.load %arg1[%c0_35, %c0_36, %c0_37] : memref<2x4x8xf32, #tpu.memory_space<vmem>>, vector<2x4x8xf32>
    %c0_38 = arith.constant 0 : index
    %c0_39 = arith.constant 0 : index
    %70 = vector.load %arg8[%c0_38, %c0_39] : memref<8x4xf32, #tpu.memory_space<vmem>>, vector<8x4xf32>
    %71 = vector.shape_cast %70 : vector<8x4xf32> to vector<1x8x4xf32>
    %72 = vector.broadcast %71 : vector<1x8x4xf32> to vector<2x8x4xf32>
    "tpu.trace_start"() <{level = 10 : i32, message = "nok,nkl->nol"}> : () -> ()
    %cst_40 = arith.constant dense<0.000000e+00> : vector<2x8x8xf32>
    %73 = tpu.matmul %72, %69, %cst_40 {dimension_numbers = #tpu.dot_dimension_numbers<[2], [1], [1], [2], [0, 0, 0, 1, 1, 2], [0], [0]>} : vector<2x8x4xf32>, vector<2x4x8xf32>, vector<2x8x8xf32> -> vector<2x8x8xf32>
    "tpu.trace_stop"() : () -> ()
    %c0_41 = arith.constant 0 : index
    %c0_42 = arith.constant 0 : index
    %c0_43 = arith.constant 0 : index
    %74 = vector.load %arg9[%c0_41, %c0_42, %c0_43] : memref<1x8x1xf32, #tpu.memory_space<vmem>>, vector<1x8x1xf32>
    %c0_44 = arith.constant 0 : index
    %c0_45 = arith.constant 0 : index
    %c0_46 = arith.constant 0 : index
    %75 = vector.load %arg10[%c0_44, %c0_45, %c0_46] : memref<1x8x1xf32, #tpu.memory_space<vmem>>, vector<1x8x1xf32>
    %cst_47 = arith.constant dense<0.000000e+00> : vector<2x8xf32>
    %76 = vector.multi_reduction <add>, %73, %cst_47 [2] : vector<2x8x8xf32> to vector<2x8xf32>
    %77 = vector.shape_cast %76 : vector<2x8xf32> to vector<2x8x1xf32>
    %cst_48 = arith.constant dense<0.000000e+00> : vector<8x1xf32>
    %78 = vector.multi_reduction <add>, %77, %cst_48 [0] : vector<2x8x1xf32> to vector<8x1xf32>
    %79 = vector.shape_cast %78 : vector<8x1xf32> to vector<1x8x1xf32>
    %cst_49 = arith.constant 1.600000e+01 : f32
    %80 = vector.broadcast %cst_49 : f32 to vector<1x8x1xf32>
    %81 = arith.divf %79, %80 : vector<1x8x1xf32>
    %82 = vector.broadcast %81 : vector<1x8x1xf32> to vector<2x8x8xf32>
    %83 = arith.subf %73, %82 : vector<2x8x8xf32>
    %84 = arith.mulf %83, %83 : vector<2x8x8xf32>
    %cst_50 = arith.constant dense<0.000000e+00> : vector<2x8xf32>
    %85 = vector.multi_reduction <add>, %84, %cst_50 [2] : vector<2x8x8xf32> to vector<2x8xf32>
    %86 = vector.shape_cast %85 : vector<2x8xf32> to vector<2x8x1xf32>
    %cst_51 = arith.constant dense<0.000000e+00> : vector<8x1xf32>
    %87 = vector.multi_reduction <add>, %86, %cst_51 [0] : vector<2x8x1xf32> to vector<8x1xf32>
    %88 = vector.shape_cast %87 : vector<8x1xf32> to vector<1x8x1xf32>
    %cst_52 = arith.constant 1.600000e+01 : f32
    %89 = vector.broadcast %cst_52 : f32 to vector<1x8x1xf32>
    %90 = arith.divf %88, %89 : vector<1x8x1xf32>
    %cst_53 = arith.constant 9.99999974E-6 : f32
    %91 = vector.broadcast %cst_53 : f32 to vector<1x8x1xf32>
    %92 = arith.addf %90, %91 : vector<1x8x1xf32>
    %93 = math.rsqrt %92 : vector<1x8x1xf32>
    %94 = vector.broadcast %93 : vector<1x8x1xf32> to vector<2x8x8xf32>
    %95 = arith.mulf %83, %94 : vector<2x8x8xf32>
    %96 = vector.broadcast %74 : vector<1x8x1xf32> to vector<2x8x8xf32>
    %97 = arith.mulf %95, %96 : vector<2x8x8xf32>
    %98 = vector.broadcast %75 : vector<1x8x1xf32> to vector<2x8x8xf32>
    %99 = arith.addf %97, %98 : vector<2x8x8xf32>
    %100 = arith.addf %68, %99 : vector<2x8x8xf32>
    %cst_54 = arith.constant 0.000000e+00 : f32
    %101 = vector.broadcast %cst_54 : f32 to vector<2x8x8xf32>
    %102 = arith.maximumf %100, %101 : vector<2x8x8xf32>
    %c0_55 = arith.constant 0 : index
    %c0_56 = arith.constant 0 : index
    %c0_57 = arith.constant 0 : index
    %103 = vector.load %arg11[%c0_55, %c0_56, %c0_57] : memref<2x8x8xf32, #tpu.memory_space<vmem>>, vector<2x8x8xf32>
    tpu.vector_store %arg11[%c0_55, %c0_56, %c0_57], %102 {strides = array<i32>} : memref<2x8x8xf32, #tpu.memory_space<vmem>>, vector<2x8x8xf32>,
    return
  }
}

</mosaic_0001>

<llo_original>
// kernel: tpu_custom_call.1
$region0: #{tpu_custom_call.1}
  #allocation0 [shape = 'u32[]', space=smem, size = 0x4, offset = 0x4, fixed_abs, tag = 'smem constant byte address 0x4 - core index']
  #allocation1 [shape = 'u32[144,128]{1,0:T(1,128)}', space=vmem, size = 0x12000, scoped, tag = 'internal scratch']
  %s0 = inlined_call_operand.vmem [shape: f32[2,12,8], index: 0, kind: input, shape index: {}]
  %s1 = inlined_call_operand.vmem [shape: f32[2,4,8], index: 1, kind: input, shape index: {}]
  %s2 = inlined_call_operand.vmem [shape: f32[8,12], index: 2, kind: input, shape index: {}]
  %s3 = inlined_call_operand.vmem [shape: f32[8,24], index: 3, kind: input, shape index: {}]
  %s4 = inlined_call_operand.vmem [shape: f32[1,8,1], index: 4, kind: input, shape index: {}]
  %s5 = inlined_call_operand.vmem [shape: f32[1,8,1], index: 5, kind: input, shape index: {}]
  %s6 = inlined_call_operand.vmem [shape: f32[1,8,1], index: 6, kind: input, shape index: {}]
  %s7 = inlined_call_operand.vmem [shape: f32[1,8,1], index: 7, kind: input, shape index: {}]
  %s8 = inlined_call_operand.vmem [shape: f32[8,4], index: 8, kind: input, shape index: {}]
  %s9 = inlined_call_operand.vmem [shape: f32[1,8,1], index: 9, kind: input, shape index: {}]
  %s10 = inlined_call_operand.vmem [shape: f32[1,8,1], index: 10, kind: input, shape index: {}]
  %s11 = inlined_call_operand.hbm [shape: f32[2,8,8], index: 11, kind: output, shape index: {}]
  %s12 = sld [smem:[#allocation0]]
  $region54: #{tpu_custom_call.1} parent=0
    _
  %s14 = ssub.s32 1, %s12
  %s15 = scalar_select 0, %s14, %s12
  $region1: #{tpu_custom_call.1} parent=0
    #allocation2 [shape = 'u8[8192]{0}', space=vmem, size = 0x2000, scoped, tag = 'output window, operand 0, single buffered']
    #allocation3 [shape = 's32[1]{0}', space=sflag, size = 0x4, scoped, tag = 'scoped memory for tpu_custom_call.1']
    %16 = vsyncpa [#allocation3], 0
    // Predicated region
    $region2: #{tpu_custom_call.1} parent=1 // pred_check
      _
    $region3: #{tpu_custom_call.1} parent=1 // pred_check_branch
      %18 = sbr.rel (0) target = $region5
    $region4: #{tpu_custom_call.1} parent=1 // pred_region
      _
    $region5: #{tpu_custom_call.1} parent=1 // pred_fallthru
      _
    // Predicated region
    $region6: #{tpu_custom_call.1} parent=1 // pred_check
      _
    $region7: #{tpu_custom_call.1} parent=1 // pred_check_branch
      %20 = sbr.rel (0) target = $region9
    $region8: #{tpu_custom_call.1} parent=1 // pred_region
      _
    $region9: #{tpu_custom_call.1} parent=1 // pred_fallthru
      _
    // Predicated region
    $region10: #{tpu_custom_call.1} parent=1 // pred_check
      _
    $region11: #{tpu_custom_call.1} parent=1 // pred_check_branch
      %22 = sbr.rel (0) target = $region13
    $region12: #{tpu_custom_call.1} parent=1 // pred_region
      _
    $region13: #{tpu_custom_call.1} parent=1 // pred_fallthru
      _
    // Predicated region
    $region14: #{tpu_custom_call.1} parent=1 // pred_check
      _
    $region15: #{tpu_custom_call.1} parent=1 // pred_check_branch
      %24 = sbr.rel (0) target = $region17
    $region16: #{tpu_custom_call.1} parent=1 // pred_region
      _
    $region17: #{tpu_custom_call.1} parent=1 // pred_fallthru
      _
    // Predicated region
    $region18: #{tpu_custom_call.1} parent=1 // pred_check
      _
    $region19: #{tpu_custom_call.1} parent=1 // pred_check_branch
      %26 = sbr.rel (0) target = $region21
    $region20: #{tpu_custom_call.1} parent=1 // pred_region
      _
    $region21: #{tpu_custom_call.1} parent=1 // pred_fallthru
      _
    // Predicated region
    $region22: #{tpu_custom_call.1} parent=1 // pred_check
      _
    $region23: #{tpu_custom_call.1} parent=1 // pred_check_branch
      %28 = sbr.rel (0) target = $region25
    $region24: #{tpu_custom_call.1} parent=1 // pred_region
      _
    $region25: #{tpu_custom_call.1} parent=1 // pred_fallthru
      _
    // Predicated region
    $region26: #{tpu_custom_call.1} parent=1 // pred_check
      _
    $region27: #{tpu_custom_call.1} parent=1 // pred_check_branch
      %30 = sbr.rel (0) target = $region29
    $region28: #{tpu_custom_call.1} parent=1 // pred_region
      _
    $region29: #{tpu_custom_call.1} parent=1 // pred_fallthru
      _
    // Predicated region
    $region30: #{tpu_custom_call.1} parent=1 // pred_check
      _
    $region31: #{tpu_custom_call.1} parent=1 // pred_check_branch
      %32 = sbr.rel (0) target = $region33
    $region32: #{tpu_custom_call.1} parent=1 // pred_region
      _
    $region33: #{tpu_custom_call.1} parent=1 // pred_fallthru
      _
    // Predicated region
    $region34: #{tpu_custom_call.1} parent=1 // pred_check
      _
    $region35: #{tpu_custom_call.1} parent=1 // pred_check_branch
      %34 = sbr.rel (0) target = $region37
    $region36: #{tpu_custom_call.1} parent=1 // pred_region
      _
    $region37: #{tpu_custom_call.1} parent=1 // pred_fallthru
      _
    // Predicated region
    $region38: #{tpu_custom_call.1} parent=1 // pred_check
      _
    $region39: #{tpu_custom_call.1} parent=1 // pred_check_branch
      %36 = sbr.rel (0) target = $region41
    $region40: #{tpu_custom_call.1} parent=1 // pred_region
      _
    $region41: #{tpu_custom_call.1} parent=1 // pred_fallthru
      _
    // Predicated region
    $region42: #{tpu_custom_call.1} parent=1 // pred_check
      _
    $region43: #{tpu_custom_call.1} parent=1 // pred_check_branch
      %38 = sbr.rel (0) target = $region45
    $region44: #{tpu_custom_call.1} parent=1 // pred_region
      _
    $region45: #{tpu_custom_call.1} parent=1 // pred_fallthru
      _
    %v39 = vld [vmem:[%s0] sm:$0xff]
    %v40 = vld [vmem:[%s0 + $0x8] sm:$0xf]
    %v41 = vld [vmem:[%s0 + $0x10] sm:$0xff]
    %v42 = vld [vmem:[%s0 + $0x18] sm:$0xf]
    %v43 = vld [vmem:[%s2] sm:$0xff]
    %vm44 = vcmask 97280
    %v46 = vsel %vm44, %v43, 0
    %vm48 = vcmask 1043456
    %v50 = vsel %vm48, %v40, 0
    %52 = vmatprep.subr.mxu0 0.0
    %53 = vmatpush1.msra.mxu0 %v39
    %54 = vmatprep.subr.mxu0 0.0
    %55 = vmatpush1.msra.mxu0 %v50
    %56 = vmatprep.subr.mxu0 0.0
    %57 = vmatpush1.msra.mxu0 0.0
    %58 = vmatprep.subr.mxu0 0.0
    %59 = vmatpush1.msra.mxu0 0.0
    %60 = vmatprep.subr.mxu0 0.0
    %61 = vmatpush1.msra.mxu0 0.0
    %62 = vmatprep.subr.mxu0 0.0
    %63 = vmatpush1.msra.mxu0 0.0
    %64 = vmatprep.subr.mxu0 0.0
    %65 = vmatpush1.msra.mxu0 0.0
    %66 = vmatprep.subr.mxu0 0.0
    %67 = vmatpush1.msra.mxu0 0.0
    %68 = vmatprep.subr.mxu0 0.0
    %69 = vmatpush1.msra.mxu0 0.0
    %70 = vmatprep.subr.mxu0 0.0
    %71 = vmatpush1.msra.mxu0 0.0
    %72 = vmatprep.subr.mxu0 0.0
    %73 = vmatpush1.msra.mxu0 0.0
    %74 = vmatprep.subr.mxu0 0.0
    %75 = vmatpush1.msra.mxu0 0.0
    %76 = vmatprep.subr.mxu0 0.0
    %77 = vmatpush1.msra.mxu0 0.0
    %78 = vmatprep.subr.mxu0 0.0
    %79 = vmatpush1.msra.mxu0 0.0
    %80 = vmatprep.subr.mxu0 0.0
    %81 = vmatpush1.msra.mxu0 0.0
    %82 = vmatprep.subr.mxu0 0.0
    %83 = vmatpush1.msra.mxu0 0.0
    %84 = vmatprep.subr.mxu0 0.0
    %85 = vmatpush1.msra.mxu0 0.0
    %86 = vmatprep.subr.mxu0 0.0
    %87 = vmatpush1.msra.mxu0 0.0
    %88 = vmatprep.subr.mxu0 0.0
    %89 = vmatpush1.msra.mxu0 0.0
    %90 = vmatprep.subr.mxu0 0.0
    %91 = vmatpush1.msra.mxu0 0.0
    %92 = vmatprep.subr.mxu0 0.0
    %93 = vmatpush1.msra.mxu0 0.0
    %94 = vmatprep.subr.mxu0 0.0
    %95 = vmatpush1.msra.mxu0 0.0
    %96 = vmatprep.subr.mxu0 0.0
    %97 = vmatpush1.msra.mxu0 0.0
    %98 = vmatprep.subr.mxu0 0.0
    %99 = vmatpush1.msra.mxu0 0.0
    %100 = vmatprep.subr.mxu0 0.0
    %101 = vmatpush1.msra.mxu0 0.0
    %102 = vmatprep.subr.mxu0 0.0
    %103 = vmatpush1.msra.mxu0 0.0
    %104 = vmatprep.subr.mxu0 0.0
    %105 = vmatpush1.msra.mxu0 0.0
    %106 = vmatprep.subr.mxu0 0.0
    %107 = vmatpush1.msra.mxu0 0.0
    %108 = vmatprep.subr.mxu0 0.0
    %109 = vmatpush1.msra.mxu0 0.0
    %110 = vmatprep.subr.mxu0 0.0
    %111 = vmatpush1.msra.mxu0 0.0
    %112 = vmatprep.subr.mxu0 0.0
    %113 = vmatpush1.msra.mxu0 0.0
    %114 = vmatprep.subr.mxu0 0.0
    %115 = vmatpush1.msra.mxu0 0.0
    %116 = vmatprep.mubr.f32.mxu0 0.0
    %117 = vmatmul.mubr.f32.gmra.mrb[0].mxu0 %v46
    %v118 = vpop.f32.mrb[0].mxu0
    %v119 = vadd.f32 0.0, %v118
    %v120 = vpop.f32.mrb[0].mxu0
    %121 = vdwg.mxu0
    %v123 = vsel %vm48, %v42, 0
    %125 = vmatprep.subr.mxu0 0.0
    %126 = vmatpush1.msra.mxu0 %v41
    %127 = vmatprep.subr.mxu0 0.0
    %128 = vmatpush1.msra.mxu0 %v123
    %129 = vmatprep.subr.mxu0 0.0
    %130 = vmatpush1.msra.mxu0 0.0
    %131 = vmatprep.subr.mxu0 0.0
    %132 = vmatpush1.msra.mxu0 0.0
    %133 = vmatprep.subr.mxu0 0.0
    %134 = vmatpush1.msra.mxu0 0.0
    %135 = vmatprep.subr.mxu0 0.0
    %136 = vmatpush1.msra.mxu0 0.0
    %137 = vmatprep.subr.mxu0 0.0
    %138 = vmatpush1.msra.mxu0 0.0
    %139 = vmatprep.subr.mxu0 0.0
    %140 = vmatpush1.msra.mxu0 0.0
    %141 = vmatprep.subr.mxu0 0.0
    %142 = vmatpush1.msra.mxu0 0.0
    %143 = vmatprep.subr.mxu0 0.0
    %144 = vmatpush1.msra.mxu0 0.0
    %145 = vmatprep.subr.mxu0 0.0
    %146 = vmatpush1.msra.mxu0 0.0
    %147 = vmatprep.subr.mxu0 0.0
    %148 = vmatpush1.msra.mxu0 0.0
    %149 = vmatprep.subr.mxu0 0.0
    %150 = vmatpush1.msra.mxu0 0.0
    %151 = vmatprep.subr.mxu0 0.0
    %152 = vmatpush1.msra.mxu0 0.0
    %153 = vmatprep.subr.mxu0 0.0
    %154 = vmatpush1.msra.mxu0 0.0
    %155 = vmatprep.subr.mxu0 0.0
    %156 = vmatpush1.msra.mxu0 0.0
    %157 = vmatprep.subr.mxu0 0.0
    %158 = vmatpush1.msra.mxu0 0.0
    %159 = vmatprep.subr.mxu0 0.0
    %160 = vmatpush1.msra.mxu0 0.0
    %161 = vmatprep.subr.mxu0 0.0
    %162 = vmatpush1.msra.mxu0 0.0
    %163 = vmatprep.subr.mxu0 0.0
    %164 = vmatpush1.msra.mxu0 0.0
    %165 = vmatprep.subr.mxu0 0.0
    %166 = vmatpush1.msra.mxu0 0.0
    %167 = vmatprep.subr.mxu0 0.0
    %168 = vmatpush1.msra.mxu0 0.0
    %169 = vmatprep.subr.mxu0 0.0
    %170 = vmatpush1.msra.mxu0 0.0
    %171 = vmatprep.subr.mxu0 0.0
    %172 = vmatpush1.msra.mxu0 0.0
    %173 = vmatprep.subr.mxu0 0.0
    %174 = vmatpush1.msra.mxu0 0.0
    %175 = vmatprep.subr.mxu0 0.0
    %176 = vmatpush1.msra.mxu0 0.0
    %177 = vmatprep.subr.mxu0 0.0
    %178 = vmatpush1.msra.mxu0 0.0
    %179 = vmatprep.subr.mxu0 0.0
    %180 = vmatpush1.msra.mxu0 0.0
    %181 = vmatprep.subr.mxu0 0.0
    %182 = vmatpush1.msra.mxu0 0.0
    %183 = vmatprep.subr.mxu0 0.0
    %184 = vmatpush1.msra.mxu0 0.0
    %185 = vmatprep.subr.mxu0 0.0
    %186 = vmatpush1.msra.mxu0 0.0
    %187 = vmatprep.subr.mxu0 0.0
    %188 = vmatpush1.msra.mxu0 0.0
    %189 = vmatprep.mubr.f32.mxu0 0.0
    %190 = vmatmul.mubr.f32.gmra.mrb[0].mxu0 %v46
    %v191 = vpop.f32.mrb[0].mxu0
    %v192 = vadd.f32 0.0, %v191
    %v193 = vpop.f32.mrb[0].mxu0
    %194 = vdwg.mxu0
    %v195 = vld [vmem:[%s4] sm:$0xff]
    %v196 = vld [vmem:[%s5] sm:$0xff]
    %vm197 = vcmask 64512
    %v198 = vsel %vm197, %v119, 0.0
    %199 = vadd.xlane.f32.xlu0 %v198
    %v200 = vpop.xlane.xlu0 %199
    %v201 = vsel %vm197, %v192, 0.0
    %202 = vadd.xlane.f32.xlu0 %v201
    %v203 = vpop.xlane.xlu0 %202
    %v204 = vadd.f32 %v200, %v203
    %v205 = vrcp.pop 16.0
    %v206 = vmul.f32 %v204, %v205
    %v207 = vsub.f32 %v119, %v206
    %v208 = vsub.f32 %v192, %v206
    %v209 = vmul.f32 %v207, %v207
    %v210 = vmul.f32 %v208, %v208
    %v211 = vsel %vm197, %v209, 0.0
    %212 = vadd.xlane.f32.xlu0 %v211
    %v213 = vpop.xlane.xlu0 %212
    %v214 = vsel %vm197, %v210, 0.0
    %215 = vadd.xlane.f32.xlu0 %v214
    %v216 = vpop.xlane.xlu0 %215
    %v217 = vadd.f32 %v213, %v216
    %v218 = vmul.f32 %v217, %v205
    %v219 = vadd.f32 %v218, 1e-05
    %v220 = vrsqrt.pop %v219
    %v221 = vmul.f32 %v207, %v220
    %v222 = vmul.f32 %v208, %v220
    %224 = vset.pattern.permute.xlu0 0
    %225 = vperm.xlu0 %224, %v195
    %v226 = vpop.permute.xlu0 %225
    %v228 = vmul.f32 %v221, %v226
    %v229 = vmul.f32 %v222, %v226
    %231 = vset.pattern.permute.xlu0 0
    %232 = vperm.xlu0 %231, %v196
    %v233 = vpop.permute.xlu0 %232
    %v235 = vadd.f32 %v228, %v233
    %v236 = vadd.f32 %v229, %v233
    %v237 = vmax.f32 %v235, 0.0
    %v238 = vmax.f32 %v236, 0.0
    %v239 = vld [vmem:[%s3] sm:$0xff]
    %242 = vrot.lane.b32.xlu0 %v237, 1
    %v243 = vpop.permute.xlu0 %242
    %244 = vrot.lane.b32.xlu0 %v238, 1
    %v245 = vpop.permute.xlu0 %244
    %vm248 = vcmask 7168
    %v249 = vsel %vm248, 0.0, %v243
    %v250 = vsel %vm248, 0.0, %v245
    %251 = vrot.lane.b32.xlu0 %v237, 127
    %v252 = vpop.permute.xlu0 %251
    %253 = vrot.lane.b32.xlu0 %v238, 127
    %v254 = vpop.permute.xlu0 %253
    %vm257 = vcmask 56320
    %v258 = vsel %vm257, %v252, 0.0
    %v259 = vsel %vm257, %v254, 0.0
    %vm260 = vcmask 195584
    %v262 = vsel %vm260, %v239, 0
    %264 = vmatprep.subr.mxu0 0.0
    %265 = vmatpush1.msra.mxu0 %v249
    %266 = vmatprep.subr.mxu0 0.0
    %267 = vmatpush1.msra.mxu0 %v237
    %268 = vmatprep.subr.mxu0 0.0
    %269 = vmatpush1.msra.mxu0 %v258
    %270 = vmatprep.subr.mxu0 0.0
    %271 = vmatpush1.msra.mxu0 0.0
    %272 = vmatprep.subr.mxu0 0.0
    %273 = vmatpush1.msra.mxu0 0.0
    %274 = vmatprep.subr.mxu0 0.0
    %275 = vmatpush1.msra.mxu0 0.0
    %276 = vmatprep.subr.mxu0 0.0
    %277 = vmatpush1.msra.mxu0 0.0
    %278 = vmatprep.subr.mxu0 0.0
    %279 = vmatpush1.msra.mxu0 0.0
    %280 = vmatprep.subr.mxu0 0.0
    %281 = vmatpush1.msra.mxu0 0.0
    %282 = vmatprep.subr.mxu0 0.0
    %283 = vmatpush1.msra.mxu0 0.0
    %284 = vmatprep.subr.mxu0 0.0
    %285 = vmatpush1.msra.mxu0 0.0
    %286 = vmatprep.subr.mxu0 0.0
    %287 = vmatpush1.msra.mxu0 0.0
    %288 = vmatprep.subr.mxu0 0.0
    %289 = vmatpush1.msra.mxu0 0.0
    %290 = vmatprep.subr.mxu0 0.0
    %291 = vmatpush1.msra.mxu0 0.0
    %292 = vmatprep.subr.mxu0 0.0
    %293 = vmatpush1.msra.mxu0 0.0
    %294 = vmatprep.subr.mxu0 0.0
    %295 = vmatpush1.msra.mxu0 0.0
    %296 = vmatprep.subr.mxu0 0.0
    %297 = vmatpush1.msra.mxu0 0.0
    %298 = vmatprep.subr.mxu0 0.0
    %299 = vmatpush1.msra.mxu0 0.0
    %300 = vmatprep.subr.mxu0 0.0
    %301 = vmatpush1.msra.mxu0 0.0
    %302 = vmatprep.subr.mxu0 0.0
    %303 = vmatpush1.msra.mxu0 0.0
    %304 = vmatprep.subr.mxu0 0.0
    %305 = vmatpush1.msra.mxu0 0.0
    %306 = vmatprep.subr.mxu0 0.0
    %307 = vmatpush1.msra.mxu0 0.0
    %308 = vmatprep.subr.mxu0 0.0
    %309 = vmatpush1.msra.mxu0 0.0
    %310 = vmatprep.subr.mxu0 0.0
    %311 = vmatpush1.msra.mxu0 0.0
    %312 = vmatprep.subr.mxu0 0.0
    %313 = vmatpush1.msra.mxu0 0.0
    %314 = vmatprep.subr.mxu0 0.0
    %315 = vmatpush1.msra.mxu0 0.0
    %316 = vmatprep.subr.mxu0 0.0
    %317 = vmatpush1.msra.mxu0 0.0
    %318 = vmatprep.subr.mxu0 0.0
    %319 = vmatpush1.msra.mxu0 0.0
    %320 = vmatprep.subr.mxu0 0.0
    %321 = vmatpush1.msra.mxu0 0.0
    %322 = vmatprep.subr.mxu0 0.0
    %323 = vmatpush1.msra.mxu0 0.0
    %324 = vmatprep.subr.mxu0 0.0
    %325 = vmatpush1.msra.mxu0 0.0
    %326 = vmatprep.subr.mxu0 0.0
    %327 = vmatpush1.msra.mxu0 0.0
    %328 = vmatprep.mubr.f32.mxu0 0.0
    %329 = vmatmul.mubr.f32.gmra.mrb[0].mxu0 %v262
    %v330 = vpop.f32.mrb[0].mxu0
    %v331 = vadd.f32 0.0, %v330
    %v332 = vpop.f32.mrb[0].mxu0
    %333 = vdwg.mxu0
    %334 = vmatprep.subr.mxu0 0.0
    %335 = vmatpush1.msra.mxu0 %v250
    %336 = vmatprep.subr.mxu0 0.0
    %337 = vmatpush1.msra.mxu0 %v238
    %338 = vmatprep.subr.mxu0 0.0
    %339 = vmatpush1.msra.mxu0 %v259
    %340 = vmatprep.subr.mxu0 0.0
    %341 = vmatpush1.msra.mxu0 0.0
    %342 = vmatprep.subr.mxu0 0.0
    %343 = vmatpush1.msra.mxu0 0.0
    %344 = vmatprep.subr.mxu0 0.0
    %345 = vmatpush1.msra.mxu0 0.0
    %346 = vmatprep.subr.mxu0 0.0
    %347 = vmatpush1.msra.mxu0 0.0
    %348 = vmatprep.subr.mxu0 0.0
    %349 = vmatpush1.msra.mxu0 0.0
    %350 = vmatprep.subr.mxu0 0.0
    %351 = vmatpush1.msra.mxu0 0.0
    %352 = vmatprep.subr.mxu0 0.0
    %353 = vmatpush1.msra.mxu0 0.0
    %354 = vmatprep.subr.mxu0 0.0
    %355 = vmatpush1.msra.mxu0 0.0
    %356 = vmatprep.subr.mxu0 0.0
    %357 = vmatpush1.msra.mxu0 0.0
    %358 = vmatprep.subr.mxu0 0.0
    %359 = vmatpush1.msra.mxu0 0.0
    %360 = vmatprep.subr.mxu0 0.0
    %361 = vmatpush1.msra.mxu0 0.0
    %362 = vmatprep.subr.mxu0 0.0
    %363 = vmatpush1.msra.mxu0 0.0
    %364 = vmatprep.subr.mxu0 0.0
    %365 = vmatpush1.msra.mxu0 0.0
    %366 = vmatprep.subr.mxu0 0.0
    %367 = vmatpush1.msra.mxu0 0.0
    %368 = vmatprep.subr.mxu0 0.0
    %369 = vmatpush1.msra.mxu0 0.0
    %370 = vmatprep.subr.mxu0 0.0
    %371 = vmatpush1.msra.mxu0 0.0
    %372 = vmatprep.subr.mxu0 0.0
    %373 = vmatpush1.msra.mxu0 0.0
    %374 = vmatprep.subr.mxu0 0.0
    %375 = vmatpush1.msra.mxu0 0.0
    %376 = vmatprep.subr.mxu0 0.0
    %377 = vmatpush1.msra.mxu0 0.0
    %378 = vmatprep.subr.mxu0 0.0
    %379 = vmatpush1.msra.mxu0 0.0
    %380 = vmatprep.subr.mxu0 0.0
    %381 = vmatpush1.msra.mxu0 0.0
    %382 = vmatprep.subr.mxu0 0.0
    %383 = vmatpush1.msra.mxu0 0.0
    %384 = vmatprep.subr.mxu0 0.0
    %385 = vmatpush1.msra.mxu0 0.0
    %386 = vmatprep.subr.mxu0 0.0
    %387 = vmatpush1.msra.mxu0 0.0
    %388 = vmatprep.subr.mxu0 0.0
    %389 = vmatpush1.msra.mxu0 0.0
    %390 = vmatprep.subr.mxu0 0.0
    %391 = vmatpush1.msra.mxu0 0.0
    %392 = vmatprep.subr.mxu0 0.0
    %393 = vmatpush1.msra.mxu0 0.0
    %394 = vmatprep.subr.mxu0 0.0
    %395 = vmatpush1.msra.mxu0 0.0
    %396 = vmatprep.subr.mxu0 0.0
    %397 = vmatpush1.msra.mxu0 0.0
    %398 = vmatprep.mubr.f32.mxu0 0.0
    %399 = vmatmul.mubr.f32.gmra.mrb[0].mxu0 %v262
    %v400 = vpop.f32.mrb[0].mxu0
    %v401 = vadd.f32 0.0, %v400
    %v402 = vpop.f32.mrb[0].mxu0
    %403 = vdwg.mxu0
    %v404 = vld [vmem:[%s6] sm:$0xff]
    %v405 = vld [vmem:[%s7] sm:$0xff]
    %v406 = vsel %vm197, %v331, 0.0
    %407 = vadd.xlane.f32.xlu0 %v406
    %v408 = vpop.xlane.xlu0 %407
    %v409 = vsel %vm197, %v401, 0.0
    %410 = vadd.xlane.f32.xlu0 %v409
    %v411 = vpop.xlane.xlu0 %410
    %v412 = vadd.f32 %v408, %v411
    %v413 = vmul.f32 %v412, %v205
    %v414 = vsub.f32 %v331, %v413
    %v415 = vsub.f32 %v401, %v413
    %v416 = vmul.f32 %v414, %v414
    %v417 = vmul.f32 %v415, %v415
    %v418 = vsel %vm197, %v416, 0.0
    %419 = vadd.xlane.f32.xlu0 %v418
    %v420 = vpop.xlane.xlu0 %419
    %v421 = vsel %vm197, %v417, 0.0
    %422 = vadd.xlane.f32.xlu0 %v421
    %v423 = vpop.xlane.xlu0 %422
    %v424 = vadd.f32 %v420, %v423
    %v425 = vmul.f32 %v424, %v205
    %v426 = vadd.f32 %v425, 1e-05
    %v427 = vrsqrt.pop %v426
    %v428 = vmul.f32 %v414, %v427
    %v429 = vmul.f32 %v415, %v427
    %431 = vset.pattern.permute.xlu0 0
    %432 = vperm.xlu0 %431, %v404
    %v433 = vpop.permute.xlu0 %432
    %v435 = vmul.f32 %v428, %v433
    %v436 = vmul.f32 %v429, %v433
    %438 = vset.pattern.permute.xlu0 0
    %439 = vperm.xlu0 %438, %v405
    %v440 = vpop.permute.xlu0 %439
    %v442 = vadd.f32 %v435, %v440
    %v443 = vadd.f32 %v436, %v440
    %v444 = vld [vmem:[%s1] sm:$0xf]
    %v445 = vld [vmem:[%s1 + $0x4] sm:$0xf]
    %v446 = vld [vmem:[%s8] sm:$0xff]
    %vm447 = vcmask 31744
    %v449 = vsel %vm447, %v446, 0
    %v452 = vsel %vm48, %v444, 0
    %454 = vmatprep.subr.mxu0 0.0
    %455 = vmatpush1.msra.mxu0 %v452
    %456 = vmatprep.subr.mxu0 0.0
    %457 = vmatpush1.msra.mxu0 0.0
    %458 = vmatprep.subr.mxu0 0.0
    %459 = vmatpush1.msra.mxu0 0.0
    %460 = vmatprep.subr.mxu0 0.0
    %461 = vmatpush1.msra.mxu0 0.0
    %462 = vmatprep.subr.mxu0 0.0
    %463 = vmatpush1.msra.mxu0 0.0
    %464 = vmatprep.subr.mxu0 0.0
    %465 = vmatpush1.msra.mxu0 0.0
    %466 = vmatprep.subr.mxu0 0.0
    %467 = vmatpush1.msra.mxu0 0.0
    %468 = vmatprep.subr.mxu0 0.0
    %469 = vmatpush1.msra.mxu0 0.0
    %470 = vmatprep.subr.mxu0 0.0
    %471 = vmatpush1.msra.mxu0 0.0
    %472 = vmatprep.subr.mxu0 0.0
    %473 = vmatpush1.msra.mxu0 0.0
    %474 = vmatprep.subr.mxu0 0.0
    %475 = vmatpush1.msra.mxu0 0.0
    %476 = vmatprep.subr.mxu0 0.0
    %477 = vmatpush1.msra.mxu0 0.0
    %478 = vmatprep.subr.mxu0 0.0
    %479 = vmatpush1.msra.mxu0 0.0
    %480 = vmatprep.subr.mxu0 0.0
    %481 = vmatpush1.msra.mxu0 0.0
    %482 = vmatprep.subr.mxu0 0.0
    %483 = vmatpush1.msra.mxu0 0.0
    %484 = vmatprep.subr.mxu0 0.0
    %485 = vmatpush1.msra.mxu0 0.0
    %486 = vmatprep.subr.mxu0 0.0
    %487 = vmatpush1.msra.mxu0 0.0
    %488 = vmatprep.subr.mxu0 0.0
    %489 = vmatpush1.msra.mxu0 0.0
    %490 = vmatprep.subr.mxu0 0.0
    %491 = vmatpush1.msra.mxu0 0.0
    %492 = vmatprep.subr.mxu0 0.0
    %493 = vmatpush1.msra.mxu0 0.0
    %494 = vmatprep.subr.mxu0 0.0
    %495 = vmatpush1.msra.mxu0 0.0
    %496 = vmatprep.subr.mxu0 0.0
    %497 = vmatpush1.msra.mxu0 0.0
    %498 = vmatprep.subr.mxu0 0.0
    %499 = vmatpush1.msra.mxu0 0.0
    %500 = vmatprep.subr.mxu0 0.0
    %501 = vmatpush1.msra.mxu0 0.0
    %502 = vmatprep.subr.mxu0 0.0
    %503 = vmatpush1.msra.mxu0 0.0
    %504 = vmatprep.subr.mxu0 0.0
    %505 = vmatpush1.msra.mxu0 0.0
    %506 = vmatprep.subr.mxu0 0.0
    %507 = vmatpush1.msra.mxu0 0.0
    %508 = vmatprep.subr.mxu0 0.0
    %509 = vmatpush1.msra.mxu0 0.0
    %510 = vmatprep.subr.mxu0 0.0
    %511 = vmatpush1.msra.mxu0 0.0
    %512 = vmatprep.subr.mxu0 0.0
    %513 = vmatpush1.msra.mxu0 0.0
    %514 = vmatprep.subr.mxu0 0.0
    %515 = vmatpush1.msra.mxu0 0.0
    %516 = vmatprep.subr.mxu0 0.0
    %517 = vmatpush1.msra.mxu0 0.0
    %518 = vmatprep.mubr.f32.mxu0 0.0
    %519 = vmatmul.mubr.f32.gmra.mrb[0].mxu0 %v449
    %v520 = vpop.f32.mrb[0].mxu0
    %v521 = vadd.f32 0.0, %v520
    %v522 = vpop.f32.mrb[0].mxu0
    %523 = vdwg.mxu0
    %v525 = vsel %vm48, %v445, 0
    %527 = vmatprep.subr.mxu0 0.0
    %528 = vmatpush1.msra.mxu0 %v525
    %529 = vmatprep.subr.mxu0 0.0
    %530 = vmatpush1.msra.mxu0 0.0
    %531 = vmatprep.subr.mxu0 0.0
    %532 = vmatpush1.msra.mxu0 0.0
    %533 = vmatprep.subr.mxu0 0.0
    %534 = vmatpush1.msra.mxu0 0.0
    %535 = vmatprep.subr.mxu0 0.0
    %536 = vmatpush1.msra.mxu0 0.0
    %537 = vmatprep.subr.mxu0 0.0
    %538 = vmatpush1.msra.mxu0 0.0
    %539 = vmatprep.subr.mxu0 0.0
    %540 = vmatpush1.msra.mxu0 0.0
    %541 = vmatprep.subr.mxu0 0.0
    %542 = vmatpush1.msra.mxu0 0.0
    %543 = vmatprep.subr.mxu0 0.0
    %544 = vmatpush1.msra.mxu0 0.0
    %545 = vmatprep.subr.mxu0 0.0
    %546 = vmatpush1.msra.mxu0 0.0
    %547 = vmatprep.subr.mxu0 0.0
    %548 = vmatpush1.msra.mxu0 0.0
    %549 = vmatprep.subr.mxu0 0.0
    %550 = vmatpush1.msra.mxu0 0.0
    %551 = vmatprep.subr.mxu0 0.0
    %552 = vmatpush1.msra.mxu0 0.0
    %553 = vmatprep.subr.mxu0 0.0
    %554 = vmatpush1.msra.mxu0 0.0
    %555 = vmatprep.subr.mxu0 0.0
    %556 = vmatpush1.msra.mxu0 0.0
    %557 = vmatprep.subr.mxu0 0.0
    %558 = vmatpush1.msra.mxu0 0.0
    %559 = vmatprep.subr.mxu0 0.0
    %560 = vmatpush1.msra.mxu0 0.0
    %561 = vmatprep.subr.mxu0 0.0
    %562 = vmatpush1.msra.mxu0 0.0
    %563 = vmatprep.subr.mxu0 0.0
    %564 = vmatpush1.msra.mxu0 0.0
    %565 = vmatprep.subr.mxu0 0.0
    %566 = vmatpush1.msra.mxu0 0.0
    %567 = vmatprep.subr.mxu0 0.0
    %568 = vmatpush1.msra.mxu0 0.0
    %569 = vmatprep.subr.mxu0 0.0
    %570 = vmatpush1.msra.mxu0 0.0
    %571 = vmatprep.subr.mxu0 0.0
    %572 = vmatpush1.msra.mxu0 0.0
    %573 = vmatprep.subr.mxu0 0.0
    %574 = vmatpush1.msra.mxu0 0.0
    %575 = vmatprep.subr.mxu0 0.0
    %576 = vmatpush1.msra.mxu0 0.0
    %577 = vmatprep.subr.mxu0 0.0
    %578 = vmatpush1.msra.mxu0 0.0
    %579 = vmatprep.subr.mxu0 0.0
    %580 = vmatpush1.msra.mxu0 0.0
    %581 = vmatprep.subr.mxu0 0.0
    %582 = vmatpush1.msra.mxu0 0.0
    %583 = vmatprep.subr.mxu0 0.0
    %584 = vmatpush1.msra.mxu0 0.0
    %585 = vmatprep.subr.mxu0 0.0
    %586 = vmatpush1.msra.mxu0 0.0
    %587 = vmatprep.subr.mxu0 0.0
    %588 = vmatpush1.msra.mxu0 0.0
    %589 = vmatprep.subr.mxu0 0.0
    %590 = vmatpush1.msra.mxu0 0.0
    %591 = vmatprep.mubr.f32.mxu0 0.0
    %592 = vmatmul.mubr.f32.gmra.mrb[0].mxu0 %v449
    %v593 = vpop.f32.mrb[0].mxu0
    %v594 = vadd.f32 0.0, %v593
    %v595 = vpop.f32.mrb[0].mxu0
    %596 = vdwg.mxu0
    %v597 = vld [vmem:[%s9] sm:$0xff]
    %v598 = vld [vmem:[%s10] sm:$0xff]
    %v599 = vsel %vm197, %v521, 0.0
    %600 = vadd.xlane.f32.xlu0 %v599
    %v601 = vpop.xlane.xlu0 %600
    %v602 = vsel %vm197, %v594, 0.0
    %603 = vadd.xlane.f32.xlu0 %v602
    %v604 = vpop.xlane.xlu0 %603
    %v605 = vadd.f32 %v601, %v604
    %v606 = vmul.f32 %v605, %v205
    %v607 = vsub.f32 %v521, %v606
    %v608 = vsub.f32 %v594, %v606
    %v609 = vmul.f32 %v607, %v607
    %v610 = vmul.f32 %v608, %v608
    %v611 = vsel %vm197, %v609, 0.0
    %612 = vadd.xlane.f32.xlu0 %v611
    %v613 = vpop.xlane.xlu0 %612
    %v614 = vsel %vm197, %v610, 0.0
    %615 = vadd.xlane.f32.xlu0 %v614
    %v616 = vpop.xlane.xlu0 %615
    %v617 = vadd.f32 %v613, %v616
    %v618 = vmul.f32 %v617, %v205
    %v619 = vadd.f32 %v618, 1e-05
    %v620 = vrsqrt.pop %v619
    %v621 = vmul.f32 %v607, %v620
    %v622 = vmul.f32 %v608, %v620
    %624 = vset.pattern.permute.xlu0 0
    %625 = vperm.xlu0 %624, %v597
    %v626 = vpop.permute.xlu0 %625
    %v628 = vmul.f32 %v621, %v626
    %v629 = vmul.f32 %v622, %v626
    %631 = vset.pattern.permute.xlu0 0
    %632 = vperm.xlu0 %631, %v598
    %v633 = vpop.permute.xlu0 %632
    %v635 = vadd.f32 %v628, %v633
    %v636 = vadd.f32 %v629, %v633
    %v637 = vadd.f32 %v442, %v635
    %v638 = vadd.f32 %v443, %v636
    %v639 = vmax.f32 %v637, 0.0
    %v640 = vmax.f32 %v638, 0.0
    %641 = vst.msk [vmem:[#allocation2] sm:$0xff] %vm197, %v639
    %642 = vst.msk [vmem:[#allocation2 + $0x8] sm:$0xff] %vm197, %v640
    // Predicated region
    $region46: #{tpu_custom_call.1} parent=1 // pred_check
      _
    $region47: #{tpu_custom_call.1} parent=1 // pred_check_branch
      %644 = sbr.rel (0) target = $region49
    $region48: #{tpu_custom_call.1} parent=1 // pred_region
      %s646 = ssub.s32 256, 256
      %647 = vsyncadd [#allocation3], %s646
      %s648 = sshll.u32 [#allocation2], 4
      %s649 = int_to_ptr.vmem [resolvable:$true] %s648
      %654 = dma.vmem_to_hbm [thread:$0]  %s649, 256, %s11, [#allocation3], 128, 128, 8
    $region49: #{tpu_custom_call.1} parent=1 // pred_fallthru
      _
    // Predicated region
    $region50: #{tpu_custom_call.1} parent=1 // pred_check
      _
    $region51: #{tpu_custom_call.1} parent=1 // pred_check_branch
      %656 = sbr.rel (0) target = $region53
    $region52: #{tpu_custom_call.1} parent=1 // pred_region
      %657 = dma.done [#allocation3], 256
    $region53: #{tpu_custom_call.1} parent=1 // pred_fallthru
      _
    %658 = vsyncpa [#allocation3], 1

</llo_original>
